<compile_context>
chip_gen: v5e
topology: v5e:2x2
jax: 0.10.0
libtpu: 0.0.40
codegen_flags: <defaults>
</compile_context>

<pallas_src>
import jax
import jax.numpy as jnp
from jax.experimental import pallas as pl
from jax.experimental.pallas import tpu as pltpu

LANE = 128


def _round_up(x, m):
    return ((x + m - 1) // m) * m


def _sublane_multiple(dtype):
    # Native second-minor tile: 8 rows for 4-byte, 16 for 2-byte, 32 for 1-byte.
    return max(8, 32 // jnp.dtype(dtype).itemsize)


def bd_loss(net_output, bound, *, tile_rows=None):
    """Boundary loss.  net_output, bound: (N, 2, L).  Returns scalar f32."""
    N, C, L = net_output.shape
    assert C == 2, "BDLoss Pallas kernel assumes 2 classes (background/foreground)"
    # TODO(synk): generalize to C > 2 foreground channels (needs full softmax).
    assert bound.shape == (N, C, L)

    x_dt, d_dt = net_output.dtype, bound.dtype
    x_bytes = jnp.dtype(x_dt).itemsize
    d_bytes = jnp.dtype(d_dt).itemsize
    row_align = max(_sublane_multiple(x_dt), _sublane_multiple(d_dt))

    # ---- lane layout: fold the channel dim into lanes (free reshape) -------
    if L % LANE == 0:
        l_eff = L
        x_in = net_output.reshape(N, 2 * L)     # free; channel c at lanes [cL,(c+1)L)
        d_in = bound.reshape(N, 2 * L)          # free; only channel 1 is ever DMA'd
        d_block_cols, d_lane_block = L, 1
    else:
        # Unaligned-L fallback: pad only the lane tail (logits + bound fg only).
        # TODO(synk): mask the lane tail in-kernel instead to remove this copy.
        l_eff = _round_up(L, LANE)
        x_in = jnp.pad(net_output, ((0, 0), (0, 0), (0, l_eff - L))).reshape(N, 2 * l_eff)
        d_in = jnp.pad(bound[:, 1, :], ((0, 0), (0, l_eff - L)))  # zero pad => 0 contrib
        d_block_cols, d_lane_block = l_eff, 0

    # ---- row tile sizing ----------------------------------------------------
    if tile_rows is None:
        budget = 3 << 20                        # ~3 MiB per logits pipeline buffer
        tile_rows = budget // (2 * l_eff * x_bytes)
    tile_rows = max(row_align, (int(tile_rows) // row_align) * row_align)
    # Keep the 2x double-buffered input blocks under ~24 MiB (fits every gen).
    per_row = 2 * (2 * l_eff * x_bytes + d_block_cols * d_bytes)
    cap = max(row_align, ((24 << 20) // per_row) // row_align * row_align)
    tile_rows = min(tile_rows, cap, _round_up(N, row_align))

    n_tiles = pl.cdiv(N, tile_rows)
    g_outer = 2 if n_tiles >= 2 else 1          # always feed both v7x TensorCores
    g_inner = pl.cdiv(n_tiles, g_outer)
    has_dup = g_outer * g_inner > n_tiles       # odd tile count -> one duplicate slot
    needs_mask = has_dup or (n_tiles * tile_rows > N)

    def row_block(i, j):
        t = i * g_inner + j
        return jnp.minimum(t, n_tiles - 1) if has_dup else t

    def kernel(x_ref, d_ref, o_ref, acc_ref):
        j = pl.program_id(1)

        @pl.when(j == 0)
        def _init():
            acc_ref[...] = jnp.zeros_like(acc_ref)

        # Cast to f32 in-kernel (inputs stay in native dtype on the wire).
        x0 = x_ref[:, pl.ds(0, l_eff)].astype(jnp.float32)
        x1 = x_ref[:, pl.ds(l_eff, l_eff)].astype(jnp.float32)
        d1 = d_ref[...].astype(jnp.float32)

        # C == 2 softmax foreground prob: p1 = 1 / (1 + exp(x0 - x1)).
        # exp may overflow to +inf for very large x0-x1; recip(inf) = 0 is
        # exactly the softmax limit, so this is safe for a loss.
        p_fg = pl.reciprocal(1.0 + jnp.exp(x0 - x1), approx=True)
        contrib = p_fg * d1

        if needs_mask:
            # Mask both the ragged row tail and any duplicated (clamped) tile.
            row0 = (pl.program_id(0) * g_inner + j) * tile_rows
            rows = row0 + jax.lax.broadcasted_iota(jnp.int32, (tile_rows, l_eff), 0)
            contrib = jnp.where(rows < N, contrib, 0.0)

        if tile_rows > 8:
            # Fold the tile into the (8, L) accumulator with pure VPU adds.
            contrib = contrib.reshape(tile_rows // 8, 8, l_eff).sum(axis=0)
        acc_ref[...] += contrib

        @pl.when(j == pl.num_programs(1) - 1)
        def _finalize():
            # One XLU reduction per outer shard; unmasked full-block store.
            o_ref[...] = jnp.zeros_like(o_ref) + jnp.sum(acc_ref[...])

    x_block_bytes = tile_rows * 2 * l_eff * x_bytes
    d_block_bytes = tile_rows * d_block_cols * d_bytes
    vmem_limit = (2 * (x_block_bytes + d_block_bytes)   # double-buffered inputs
                  + 8 * l_eff * 4                       # accumulator scratch
                  + 2 * 8 * LANE * 4                    # output block
                  + (4 << 20))                          # margin for spills
    vmem_limit = int(min(max(vmem_limit, 16 << 20), 30 << 20))

    grid_spec = pltpu.PrefetchScalarGridSpec(
        num_scalar_prefetch=0,
        grid=(g_outer, g_inner),
        in_specs=[
            # Both logit channels as one contiguous lane-dense block.
            pl.BlockSpec((tile_rows, 2 * l_eff), lambda i, j: (row_block(i, j), 0)),
            # Foreground bound channel only.
            pl.BlockSpec((tile_rows, d_block_cols),
                         lambda i, j: (row_block(i, j), d_lane_block)),
        ],
        out_specs=pl.BlockSpec((1, 8, LANE), lambda i, j: (i, 0, 0)),
        scratch_shapes=[pltpu.VMEM((8, l_eff), jnp.float32)],
    )

    partials = pl.pallas_call(
        kernel,
        out_shape=jax.ShapeDtypeStruct((g_outer, 8, LANE), jnp.float32),
        grid_spec=grid_spec,
        compiler_params=pltpu.CompilerParams(
            dimension_semantics=("parallel", "arbitrary"),
            vmem_limit_bytes=vmem_limit,
        ),
        cost_estimate=pl.CostEstimate(
            flops=6 * N * l_eff,
            transcendentals=N * l_eff,
            bytes_accessed=N * (2 * l_eff * x_bytes + d_block_cols * d_bytes)
            + g_outer * 8 * LANE * 4,
        ),
    )(x_in, d_in)

    # Mean over the (N, C-1, L) foreground slice of the *unpadded* input.
    return jnp.sum(partials[:, 0, 0]) / (N * L)


if __name__ == "__main__":
    key = jax.random.PRNGKey(0)
    k1, k2 = jax.random.split(key)
    N, C, L = 48, 2, 256
    net_output = jax.random.normal(k1, (N, C, L), dtype=jnp.float32)
    bound = jax.random.normal(k2, (N, C, L), dtype=jnp.float32) * 0.5 + 1.0

    def ref_loss(x, d):
        p = jax.nn.softmax(x.astype(jnp.float32), axis=1)
        return jnp.mean(p[:, 1:, :] * d.astype(jnp.float32)[:, 1:, :])

    # 1) Small tiles: multi-step inner axis, 2-wide parallel axis, and one
    #    clamped duplicate tile slot (n_tiles=3 on a 2x2 grid) -> row masking.
    loss_tiled = bd_loss(net_output, bound, tile_rows=16)
    # 2) Auto-sized tiles (single tile at this toy size, no masking path).
    loss_auto = bd_loss(net_output, bound)
    # 3) bf16 logits end-to-end (no wrapper upcast) with a ragged row tail.
    net_bf16 = net_output.astype(jnp.bfloat16)
    loss_bf16 = bd_loss(net_bf16, bound, tile_rows=32)
    jax.block_until_ready((loss_tiled, loss_auto, loss_bf16))

    ref32 = ref_loss(net_output, bound)
    refbf = ref_loss(net_bf16, bound)

    assert jnp.allclose(loss_tiled, ref32, atol=2e-3, rtol=2e-3), (loss_tiled, ref32)
    assert jnp.allclose(loss_auto, ref32, atol=2e-3, rtol=2e-3), (loss_auto, ref32)
    assert jnp.allclose(loss_bf16, refbf, atol=5e-3, rtol=5e-3), (loss_bf16, refbf)
    print("KERNEL_OK")
</pallas_src>

<mosaic_0001>
module attributes {stable_mosaic.version = 11 : i64} {
  func.func @kernel(%arg0: i32, %arg1: i32, %arg2: memref<16x512xf32, #tpu.memory_space<vmem>>, %arg3: memref<16x256xf32, #tpu.memory_space<vmem>>, %arg4: memref<1x8x128xf32, #tpu.memory_space<vmem>>, %arg5: memref<8x256xf32, #tpu.memory_space<vmem>>) attributes {dimension_semantics = [#tpu.dimension_semantics<parallel>, #tpu.dimension_semantics<arbitrary>], iteration_bounds = array<i64: 2, 2>, scalar_prefetch = 0 : i64, scratch_operands = 1 : i64, tpu.core_type = #tpu.core_type<tc>, window_params = [{transform_indices = @transform_0, window_bounds = array<i64: 16, 512>}, {transform_indices = @transform_1, window_bounds = array<i64: 16, 256>}, {transform_indices = @transform_2, window_bounds = array<i64: 1, 8, 128>}]} {
    %c0_i32 = arith.constant 0 : i32
    %0 = arith.cmpi eq, %arg1, %c0_i32 : i32
    %1 = arith.extui %0 : i1 to i32
    %c0_i32_0 = arith.constant 0 : i32
    %2 = arith.cmpi ne, %1, %c0_i32_0 : i32
    scf.if %2 {
      %cst_12 = arith.constant 0.000000e+00 : f32
      %30 = vector.broadcast %cst_12 : f32 to vector<8x256xf32>
      %c0_13 = arith.constant 0 : index
      %c0_14 = arith.constant 0 : index
      %31 = vector.load %arg5[%c0_13, %c0_14] : memref<8x256xf32, #tpu.memory_space<vmem>>, vector<8x256xf32>
      tpu.vector_store %arg5[%c0_13, %c0_14], %30 {strides = array<i32>} : memref<8x256xf32, #tpu.memory_space<vmem>>, vector<8x256xf32>,
    } else {
    }
    %c0 = arith.constant 0 : index
    %c0_1 = arith.constant 0 : index
    %3 = vector.load %arg2[%c0, %c0_1] : memref<16x512xf32, #tpu.memory_space<vmem>>, vector<16x256xf32>
    %c0_2 = arith.constant 0 : index
    %c256 = arith.constant 256 : index
    %4 = vector.load %arg2[%c0_2, %c256] : memref<16x512xf32, #tpu.memory_space<vmem>>, vector<16x256xf32>
    %c0_3 = arith.constant 0 : index
    %c0_4 = arith.constant 0 : index
    %5 = vector.load %arg3[%c0_3, %c0_4] : memref<16x256xf32, #tpu.memory_space<vmem>>, vector<16x256xf32>
    %6 = arith.subf %3, %4 : vector<16x256xf32>
    %7 = math.exp %6 : vector<16x256xf32>
    %cst = arith.constant 1.000000e+00 : f32
    %8 = vector.broadcast %cst : f32 to vector<16x256xf32>
    %9 = arith.addf %8, %7 : vector<16x256xf32>
    %10 = tpu.reciprocal %9 {approx = true} : vector<16x256xf32> -> vector<16x256xf32>
    %11 = arith.mulf %10, %5 : vector<16x256xf32>
    %c2_i32 = arith.constant 2 : i32
    %12 = arith.muli %arg0, %c2_i32 : i32
    %13 = arith.addi %12, %arg1 : i32
    %c16_i32 = arith.constant 16 : i32
    %14 = arith.muli %13, %c16_i32 : i32
    %15 = tpu.iota {dimensions = array<i32: 0>} : vector<16x256xi32>
    %16 = vector.broadcast %14 : i32 to vector<16x256xi32>
    %17 = arith.addi %16, %15 : vector<16x256xi32>
    %c48_i32 = arith.constant 48 : i32
    %18 = vector.broadcast %c48_i32 : i32 to vector<16x256xi32>
    %19 = arith.cmpi slt, %17, %18 : vector<16x256xi32>
    %cst_5 = arith.constant 0.000000e+00 : f32
    %20 = vector.broadcast %cst_5 : f32 to vector<16x256xf32>
    %21 = arith.select %19, %11, %20 : vector<16x256xi1>, vector<16x256xf32>
    %22 = vector.shape_cast %21 : vector<16x256xf32> to vector<2x8x256xf32>
    %cst_6 = arith.constant dense<0.000000e+00> : vector<8x256xf32>
    %23 = vector.multi_reduction <add>, %22, %cst_6 [0] : vector<2x8x256xf32> to vector<8x256xf32>
    %c0_7 = arith.constant 0 : index
    %c0_8 = arith.constant 0 : index
    %24 = vector.load %arg5[%c0_7, %c0_8] : memref<8x256xf32, #tpu.memory_space<vmem>>, vector<8x256xf32>
    %25 = arith.addf %24, %23 : vector<8x256xf32>
    %c0_9 = arith.constant 0 : index
    %c0_10 = arith.constant 0 : index
    %26 = vector.load %arg5[%c0_9, %c0_10] : memref<8x256xf32, #tpu.memory_space<vmem>>, vector<8x256xf32>
    tpu.vector_store %arg5[%c0_9, %c0_10], %25 {strides = array<i32>} : memref<8x256xf32, #tpu.memory_space<vmem>>, vector<8x256xf32>,
    %c1_i32 = arith.constant 1 : i32
    %27 = arith.cmpi eq, %arg1, %c1_i32 : i32
    %28 = arith.extui %27 : i1 to i32
    %c0_i32_11 = arith.constant 0 : i32
    %29 = arith.cmpi ne, %28, %c0_i32_11 : i32
    scf.if %29 {
      %cst_12 = arith.constant 0.000000e+00 : f32
      %30 = vector.broadcast %cst_12 : f32 to vector<1x8x128xf32>
      %c0_13 = arith.constant 0 : index
      %c0_14 = arith.constant 0 : index
      %31 = vector.load %arg5[%c0_13, %c0_14] : memref<8x256xf32, #tpu.memory_space<vmem>>, vector<8x256xf32>
      %32 = vector.shape_cast %31 : vector<8x256xf32> to vector<1x8x256xf32>
      %cst_15 = arith.constant dense<0.000000e+00> : vector<1xf32>
      %33 = vector.multi_reduction <add>, %32, %cst_15 [1, 2] : vector<1x8x256xf32> to vector<1xf32>
      %34 = vector.shape_cast %33 : vector<1xf32> to vector<1x1x1xf32>
      %35 = vector.extract %34[0, 0, 0] : f32 from vector<1x1x1xf32>
      %36 = vector.broadcast %35 : f32 to vector<1x8x128xf32>
      %37 = arith.addf %30, %36 : vector<1x8x128xf32>
      %c0_16 = arith.constant 0 : index
      %c0_17 = arith.constant 0 : index
      %c0_18 = arith.constant 0 : index
      %38 = vector.load %arg4[%c0_16, %c0_17, %c0_18] : memref<1x8x128xf32, #tpu.memory_space<vmem>>, vector<1x8x128xf32>
      tpu.vector_store %arg4[%c0_16, %c0_17, %c0_18], %37 {strides = array<i32>} : memref<1x8x128xf32, #tpu.memory_space<vmem>>, vector<1x8x128xf32>,
    } else {
    }
    return
  }
  func.func @transform_0(%arg0: i32, %arg1: i32) -> (i32, i32) {
    %c2_i32 = arith.constant 2 : i32
    %0 = arith.muli %arg0, %c2_i32 : i32
    %1 = arith.addi %0, %arg1 : i32
    %c2_i32_0 = arith.constant 2 : i32
    %2 = arith.minsi %1, %c2_i32_0 : i32
    %c0_i32 = arith.constant 0 : i32
    %c0_i32_1 = arith.constant 0 : i32
    return %2, %c0_i32 : i32, i32
  }
  func.func @transform_1(%arg0: i32, %arg1: i32) -> (i32, i32) {
    %c2_i32 = arith.constant 2 : i32
    %0 = arith.muli %arg0, %c2_i32 : i32
    %1 = arith.addi %0, %arg1 : i32
    %c2_i32_0 = arith.constant 2 : i32
    %2 = arith.minsi %1, %c2_i32_0 : i32
    %c1_i32 = arith.constant 1 : i32
    %c0_i32 = arith.constant 0 : i32
    return %2, %c1_i32 : i32, i32
  }
  func.func @transform_2(%arg0: i32, %arg1: i32) -> (i32, i32, i32) {
    %c0_i32 = arith.constant 0 : i32
    %c0_i32_0 = arith.constant 0 : i32
    %c0_i32_1 = arith.constant 0 : i32
    return %arg0, %c0_i32, %c0_i32_0 : i32, i32, i32
  }
}

</mosaic_0001>

<llo_original>
// kernel: tpu_custom_call.1
$region0: #{tpu_custom_call.1}
  #allocation0 [shape = 'u32[]', space=smem, size = 0x4, offset = 0x4, fixed_abs, tag = 'smem constant byte address 0x4 - core index']
  #allocation1 [shape = 'u32[72,128]{1,0:T(1,128)}', space=vmem, size = 0x9000, scoped, tag = 'internal scratch']
  #allocation2 [shape = 'f32[8,256]{1,0:T(8,128)}', space=vmem, size = 0x2000, scoped, tag = 'scratch operand']
  %s0 = inlined_call_operand.hbm [shape: f32[48,512], index: 0, kind: input, shape index: {}]
  %s1 = inlined_call_operand.hbm [shape: f32[48,512], index: 1, kind: input, shape index: {}]
  %s2 = inlined_call_operand.hbm [shape: f32[2,8,128], index: 2, kind: output, shape index: {}]
  %s3 = sld [smem:[#allocation0]]
  $region57: #{tpu_custom_call.1} parent=0
    _
  %s5 = ssub.s32 1, %s3
  %s6 = scalar_select 0, %s5, %s3
  $region1: #{tpu_custom_call.1} parent=0
    #allocation3 [shape = 'u8[65536]{0}', space=vmem, size = 0x10000, scoped, tag = 'input window, operand 0']
    #allocation4 [shape = 's32[2]{0}', space=sflag, size = 0x8, scoped, tag = 'scoped memory for tpu_custom_call.1']
    #allocation5 [shape = 's32[2]{0}', space=sflag, size = 0x8, scoped, tag = 'scoped memory for tpu_custom_call.1']
    #allocation6 [shape = 'u8[32768]{0}', space=vmem, size = 0x8000, scoped, tag = 'input window, operand 1']
    #allocation7 [shape = 's32[2]{0}', space=sflag, size = 0x8, scoped, tag = 'scoped memory for tpu_custom_call.1']
    #allocation8 [shape = 'u8[8192]{0}', space=vmem, size = 0x2000, scoped, tag = 'output window, operand 0']
    %7 = vsyncpa [#allocation4], 0
    %s8 = scalar_lea.sflag [#allocation4], 1
    %9 = vsyncpa %s8, 0
    %10 = vsyncpa [#allocation7], 0
    %s11 = scalar_lea.sflag [#allocation7], 1
    %12 = vsyncpa %s11, 0
    %13 = vsyncpa [#allocation5], 0
    %s14 = scalar_lea.sflag [#allocation5], 1
    %15 = vsyncpa %s14, 0
    loop: start=0, step=1, limit=6
    $region2: #{tpu_custom_call.1} parent=1 // loop_pre_header
      _
    $region3: #{tpu_custom_call.1} parent=1 // loop_header
      %s17 = sphi 0, %s21
      %p18 = scmp.ge.s32.totalorder %s17, 6
      %s24 = sphi 0, %s36
      %s25 = sphi 0, %s32
      %s26 = sphi 0, %s24
      %s27 = sphi 0, %s25
      %s28 = sphi 0, %s26
      %s29 = sphi 0, %s27
      %s47 = sphi 0, %s49
      %s50 = sphi 0, %s47
      %s51 = sphi 0, %s50
      %s67 = sphi 0, %s51
      %s81 = sphi 0, %s83
      %s84 = sphi 0, %s81
      %s85 = sphi 0, %s84
      %s101 = sphi 0, %s85
      %s107 = sphi 0, %s109
      %s110 = sphi 0, %s107
      %s111 = sphi 0, %s110
      %s127 = sphi 0, %s111
    $region4: #{tpu_custom_call.1} parent=1 // loop_header_branch
      %20 = sbr.rel (%p18) target = $region8
    $region5: #{tpu_custom_call.1} parent=1 // loop_body
      %s22 = ssub.s32 %s17, 1
      %s23 = ssub.s32 %s17, 2
      %s30 = sadd.s32 1, %s25
      %p31 = scmp.ge.s32.totalorder %s30, 2
      %s32 = scalar_select %p31, 0, %s30
      %s33 = sadd.s32 1, %s24
      %s34 = scalar_select %p31, %s33, %s24
      %p35 = scmp.ge.s32.totalorder %s34, 2
      %s36 = scalar_select %p35, 0, %s34
      %s37 = smul.u32 %s24, 2
      %s38 = sadd.s32 %s37, %s25
      %p39 = scmp.lt.s32.totalorder %s38, 2
      %s40 = scalar_select %p39, %s38, 2
      %s41 = smul.u32 %s36, 2
      %s42 = sadd.s32 %s41, %s32
      %p43 = scmp.lt.s32.totalorder %s42, 2
      %s44 = scalar_select %p43, %s42, 2
      %s45 = ssub.s32 %s40, %s44
      %p46 = scmp.eq.s32.totalorder %s45, 0
      %s48 = sadd.s32 %s47, 1
      %s49 = scalar_select %p46, %s47, %s48
      %p52 = pneg %p46
      %p53 = scmp.eq.s32.totalorder %s17, 3
      %p54 = por %p52, %p53
      %p55 = scmp.ne.s32.totalorder %s47, %s50
      %p56 = scmp.eq.s32.totalorder %s17, 0
      %p57 = por %p55, %p56
      %p58 = scmp.ne.s32.totalorder %s47, %s50
      %p59 = scmp.eq.s32.totalorder %s22, 3
      %p60 = por %p58, %p59
      %p61 = scmp.ne.s32.totalorder %s50, %s51
      %p62 = scmp.eq.s32.totalorder %s22, 0
      %p63 = por %p61, %p62
      %p64 = scmp.ne.s32.totalorder %s50, %s51
      %p65 = scmp.eq.s32.totalorder %s23, 3
      %p66 = por %p64, %p65
      %p68 = scmp.ne.s32.totalorder %s51, %s67
      %p69 = scmp.eq.s32.totalorder %s23, 0
      %p70 = por %p68, %p69
      %s71 = smul.u32 %s24, 2
      %s72 = sadd.s32 %s71, %s25
      %p73 = scmp.lt.s32.totalorder %s72, 2
      %s74 = scalar_select %p73, %s72, 2
      %s75 = smul.u32 %s36, 2
      %s76 = sadd.s32 %s75, %s32
      %p77 = scmp.lt.s32.totalorder %s76, 2
      %s78 = scalar_select %p77, %s76, 2
      %s79 = ssub.s32 %s74, %s78
      %p80 = scmp.eq.s32.totalorder %s79, 0
      %s82 = sadd.s32 %s81, 1
      %s83 = scalar_select %p80, %s81, %s82
      %p86 = pneg %p80
      %p87 = scmp.eq.s32.totalorder %s17, 3
      %p88 = por %p86, %p87
      %p89 = scmp.ne.s32.totalorder %s81, %s84
      %p90 = scmp.eq.s32.totalorder %s17, 0
      %p91 = por %p89, %p90
      %p92 = scmp.ne.s32.totalorder %s81, %s84
      %p93 = scmp.eq.s32.totalorder %s22, 3
      %p94 = por %p92, %p93
      %p95 = scmp.ne.s32.totalorder %s84, %s85
      %p96 = scmp.eq.s32.totalorder %s22, 0
      %p97 = por %p95, %p96
      %p98 = scmp.ne.s32.totalorder %s84, %s85
      %p99 = scmp.eq.s32.totalorder %s23, 3
      %p100 = por %p98, %p99
      %p102 = scmp.ne.s32.totalorder %s85, %s101
      %p103 = scmp.eq.s32.totalorder %s23, 0
      %p104 = por %p102, %p103
      %s105 = ssub.s32 %s24, %s36
      %p106 = scmp.eq.s32.totalorder %s105, 0
      %s108 = sadd.s32 %s107, 1
      %s109 = scalar_select %p106, %s107, %s108
      %p112 = pneg %p106
      %p113 = scmp.eq.s32.totalorder %s17, 3
      %p114 = por %p112, %p113
      %p115 = scmp.ne.s32.totalorder %s107, %s110
      %p116 = scmp.eq.s32.totalorder %s17, 0
      %p117 = por %p115, %p116
      %p118 = scmp.ne.s32.totalorder %s107, %s110
      %p119 = scmp.eq.s32.totalorder %s22, 3
      %p120 = por %p118, %p119
      %p121 = scmp.ne.s32.totalorder %s110, %s111
      %p122 = scmp.eq.s32.totalorder %s22, 0
      %p123 = por %p121, %p122
      %p124 = scmp.ne.s32.totalorder %s110, %s111
      %p125 = scmp.eq.s32.totalorder %s23, 3
      %p126 = por %p124, %p125
      %p128 = scmp.ne.s32.totalorder %s111, %s127
      %p129 = scmp.eq.s32.totalorder %s23, 0
      %p130 = por %p128, %p129
      %p131 = scmp.le.s32.totalorder 1, %s17
      %p132 = scmp.lt.s32.totalorder %s17, 5
      %p133 = pnand %p131, %p132
      %p134 = pneg %p133
      // Predicated region
      $region9: #{tpu_custom_call.1} parent=5 // pred_check
        _
      $region10: #{tpu_custom_call.1} parent=5 // pred_check_branch
        %136 = sbr.rel (%p133) target = $region12
      $region11: #{tpu_custom_call.1} parent=5 // pred_region
        %s137 = ssub.s32 %s17, 1
      $region12: #{tpu_custom_call.1} parent=5 // pred_fallthru
        _
      %p138 = scmp.lt.s32.totalorder %s17, 4
      // Predicated region
      $region13: #{tpu_custom_call.1} parent=5 // pred_check
        %p139 = pneg %p138
      $region14: #{tpu_custom_call.1} parent=5 // pred_check_branch
        %141 = sbr.rel (%p139) target = $region16
      $region15: #{tpu_custom_call.1} parent=5 // pred_region
        // Predicated region
        $region17: #{tpu_custom_call.1} parent=15 // pred_check
          %p142 = pneg %p57
        $region18: #{tpu_custom_call.1} parent=15 // pred_check_branch
          %144 = sbr.rel (%p142) target = $region20
        $region19: #{tpu_custom_call.1} parent=15 // pred_region
          %s145 = sand.u32 %s47, 1
          %s146 = scalar_lea.sflag [#allocation4], %s145
          %s147 = sand.u32 %s47, 1
          %s148 = smul.addr %s147, 64
          %s149 = scalar_lea.vmem [#allocation3], %s148
          %s150 = smul.u32 %s24, 2
          %s151 = sadd.s32 %s150, %s25
          %p152 = scmp.lt.s32.totalorder %s151, 2
          %s153 = scalar_select %p152, %s151, 2
          %s154 = smul.u32 2, %s153
          %156 = vsyncadd %s146, 0
          %s157 = smul.addr %s154, 4
          %s158 = smul.addr %s157, 8
          %s159 = scalar_lea.hbm %s0, %s158
          %s160 = sshll.u32 %s159, 4
          %s161 = int_to_ptr.hbm [resolvable:$true] %s160
          %s162 = sshll.u32 %s149, 4
          %s163 = int_to_ptr.vmem [resolvable:$true] %s162
          %168 = dma.hbm_to_vmem [thread:$0]  %s161, 1024, %s163, %s146, 512, 512, 32
        $region20: #{tpu_custom_call.1} parent=15 // pred_fallthru
          _
        // Predicated region
        $region21: #{tpu_custom_call.1} parent=15 // pred_check
          %p169 = pneg %p91
        $region22: #{tpu_custom_call.1} parent=15 // pred_check_branch
          %171 = sbr.rel (%p169) target = $region24
        $region23: #{tpu_custom_call.1} parent=15 // pred_region
          %s172 = sand.u32 %s81, 1
          %s173 = scalar_lea.sflag [#allocation7], %s172
          %s174 = sand.u32 %s81, 1
          %s175 = smul.addr %s174, 32
          %s176 = scalar_lea.vmem [#allocation6], %s175
          %s177 = smul.u32 %s24, 2
          %s178 = sadd.s32 %s177, %s25
          %p179 = scmp.lt.s32.totalorder %s178, 2
          %s180 = scalar_select %p179, %s178, 2
          %s181 = smul.u32 2, %s180
          %183 = vsyncadd %s173, 0
          %s184 = smul.addr %s181, 4
          %s185 = sadd.s32 2, %s184
          %s186 = smul.addr %s185, 8
          %s187 = scalar_lea.hbm %s1, %s186
          %s188 = sshll.u32 %s187, 4
          %s189 = int_to_ptr.hbm [resolvable:$true] %s188
          %s190 = sshll.u32 %s176, 4
          %s191 = int_to_ptr.vmem [resolvable:$true] %s190
          %196 = dma.hbm_to_vmem [thread:$0]  %s189, 512, %s191, %s173, 512, 256, 16
        $region24: #{tpu_custom_call.1} parent=15 // pred_fallthru
          _
      $region16: #{tpu_custom_call.1} parent=5 // pred_fallthru
        _
      %p197 = scmp.le.s32.totalorder 1, %s17
      %p198 = scmp.lt.s32.totalorder %s17, 5
      %p199 = pnand %p197, %p198
      %p200 = pneg %p199
      // Predicated region
      $region25: #{tpu_custom_call.1} parent=5 // pred_check
        _
      $region26: #{tpu_custom_call.1} parent=5 // pred_check_branch
        %202 = sbr.rel (%p199) target = $region28
      $region27: #{tpu_custom_call.1} parent=5 // pred_region
        %s203 = ssub.s32 %s17, 1
        %s204 = sand.u32 %s50, 1
        %s205 = scalar_lea.sflag [#allocation4], %s204
        %s206 = sand.u32 %s50, 1
        %s207 = smul.addr %s206, 64
        %s208 = scalar_lea.vmem [#allocation3], %s207
        // Predicated region
        $region29: #{tpu_custom_call.1} parent=27 // pred_check
          %p209 = pneg %p63
        $region30: #{tpu_custom_call.1} parent=27 // pred_check_branch
          %211 = sbr.rel (%p209) target = $region32
        $region31: #{tpu_custom_call.1} parent=27 // pred_region
          %213 = dma.done %s205, 1024
        $region32: #{tpu_custom_call.1} parent=27 // pred_fallthru
          _
        %s214 = sand.u32 %s84, 1
        %s215 = scalar_lea.sflag [#allocation7], %s214
        %s216 = sand.u32 %s84, 1
        %s217 = smul.addr %s216, 32
        %s218 = scalar_lea.vmem [#allocation6], %s217
        // Predicated region
        $region33: #{tpu_custom_call.1} parent=27 // pred_check
          %p219 = pneg %p97
        $region34: #{tpu_custom_call.1} parent=27 // pred_check_branch
          %221 = sbr.rel (%p219) target = $region36
        $region35: #{tpu_custom_call.1} parent=27 // pred_region
          %223 = dma.done %s215, 512
        $region36: #{tpu_custom_call.1} parent=27 // pred_fallthru
          _
        %s224 = sand.u32 %s50, 1
        %s225 = scalar_lea.sflag [#allocation4], %s224
        %s226 = sand.u32 %s50, 1
        %s227 = smul.addr %s226, 64
        %s228 = scalar_lea.vmem [#allocation3], %s227
        %p229 = pneg %p63
        %p230 = pneg %p60
        %s231 = sand.u32 %s84, 1
        %s232 = scalar_lea.sflag [#allocation7], %s231
        %s233 = sand.u32 %s84, 1
        %s234 = smul.addr %s233, 32
        %s235 = scalar_lea.vmem [#allocation6], %s234
        %p236 = pneg %p97
        %p237 = pneg %p94
        %p238 = pneg %p123
        %p239 = pneg %p120
        %s240 = sand.u32 %s110, 1
        %s241 = scalar_lea.sflag [#allocation5], %s240
        %s242 = sand.u32 %s110, 1
        %s243 = smul.addr %s242, 8
        %s244 = scalar_lea.vmem [#allocation8], %s243
        %s245 = smul.u32 %s26, 2
        %s246 = sadd.s32 %s245, %s27
        %p247 = scmp.lt.s32.totalorder %s246, 2
        %s248 = scalar_select %p247, %s246, 2
        %s249 = smul.u32 2, %s248
        %s250 = smul.u32 %s26, 2
        %s251 = sadd.s32 %s250, %s27
        %p252 = scmp.lt.s32.totalorder %s251, 2
        %s253 = scalar_select %p252, %s251, 2
        %s254 = smul.u32 2, %s253
        %p255 = scmp.eq.s32.totalorder %s27, 0
        // Predicated region
        $region37: #{tpu_custom_call.1} parent=27 // pred_check
          %p256 = pneg %p255
        $region38: #{tpu_custom_call.1} parent=27 // pred_check_branch
          %258 = sbr.rel (%p256) target = $region40
        $region39: #{tpu_custom_call.1} parent=27 // pred_region
          %259 = vst [vmem:[#allocation2] sm:$0xff] 0.0
          %260 = vst [vmem:[#allocation2 + $0x8] sm:$0xff] 0.0
        $region40: #{tpu_custom_call.1} parent=27 // pred_fallthru
          _
        %v261 = vld [vmem:[%s208] sm:$0xff]
        %v262 = vld [vmem:[%s208 + $0x8] sm:$0xff]
        %v263 = vld [vmem:[%s208 + $0x20] sm:$0xff]
        %v264 = vld [vmem:[%s208 + $0x28] sm:$0xff]
        %v265 = vld [vmem:[%s208 + $0x10] sm:$0xff]
        %v266 = vld [vmem:[%s208 + $0x18] sm:$0xff]
        %v267 = vld [vmem:[%s208 + $0x30] sm:$0xff]
        %v268 = vld [vmem:[%s208 + $0x38] sm:$0xff]
        %v269 = vld [vmem:[%s218] sm:$0xff]
        %v270 = vld [vmem:[%s218 + $0x8] sm:$0xff]
        %v271 = vld [vmem:[%s218 + $0x10] sm:$0xff]
        %v272 = vld [vmem:[%s218 + $0x18] sm:$0xff]
        %v273 = vsub.f32 %v261, %v265
        %v274 = vsub.f32 %v262, %v266
        %v275 = vsub.f32 %v263, %v267
        %v276 = vsub.f32 %v264, %v268
        %v277 = vmul.f32 %v273, 1.442695
        %v278 = vpow.pop %v277
        %v279 = vmul.f32 %v274, 1.442695
        %v280 = vpow.pop %v279
        %v281 = vmul.f32 %v275, 1.442695
        %v282 = vpow.pop %v281
        %v283 = vmul.f32 %v276, 1.442695
        %v284 = vpow.pop %v283
        %v285 = vadd.f32 %v278, 1.0
        %v286 = vadd.f32 %v280, 1.0
        %v287 = vadd.f32 %v282, 1.0
        %v288 = vadd.f32 %v284, 1.0
        %v289 = vrcp.pop %v285
        %v290 = vrcp.pop %v286
        %v291 = vrcp.pop %v287
        %v292 = vrcp.pop %v288
        %v293 = vmul.f32 %v289, %v269
        %v294 = vmul.f32 %v290, %v270
        %v295 = vmul.f32 %v291, %v271
        %v296 = vmul.f32 %v292, %v272
        %s297 = smul.u32 %s26, 2
        %s298 = sadd.s32 %s297, %s27
        %s299 = smul.u32 %s298, 16
        %v300 = vlaneseq
        %v301 = vshrl.u32 %v300, 7
        %v302 = vadd.s32 %v301, 8
        %v303 = vstv %s299
        %v304 = vadd.s32 %v303, %v301
        %v305 = vadd.s32 %v303, %v302
        %vm306 = vcmp.lt.s32.totalorder %v304, 48
        %vm307 = vcmp.lt.s32.totalorder %v305, 48
        %v308 = vsel %vm306, %v293, 0.0
        %v309 = vsel %vm306, %v294, 0.0
        %v310 = vsel %vm307, %v295, 0.0
        %v311 = vsel %vm307, %v296, 0.0
        %v312 = vadd.f32 %v308, %v310
        %v313 = vadd.f32 %v309, %v311
        %v314 = vld [vmem:[#allocation2] sm:$0xff]
        %v315 = vld [vmem:[#allocation2 + $0x8] sm:$0xff]
        %v316 = vadd.f32 %v314, %v312
        %v317 = vadd.f32 %v315, %v313
        %318 = vst [vmem:[#allocation2] sm:$0xff] %v316
        %319 = vst [vmem:[#allocation2 + $0x8] sm:$0xff] %v317
        %p320 = scmp.eq.s32.totalorder %s27, 1
        // Predicated region
        $region41: #{tpu_custom_call.1} parent=27 // pred_check
          %p321 = pneg %p320
        $region42: #{tpu_custom_call.1} parent=27 // pred_check_branch
          %323 = sbr.rel (%p321) target = $region44
        $region43: #{tpu_custom_call.1} parent=27 // pred_region
          %v324 = vld [vmem:[#allocation2] sm:$0xff]
          %v325 = vld [vmem:[#allocation2 + $0x8] sm:$0xff]
          %v326 = vadd.f32 %v324, %v325
          %327 = vadd.xlane.f32.xlu0 %v326
          %v328 = vpop.xlane.xlu0 %327
          %v329 = vrot.slane %v328, 4
          %v330 = vadd.f32 %v328, %v329
          %v331 = vrot.slane %v330, 2
          %v332 = vadd.f32 %v330, %v331
          %v333 = vrot.slane %v332, 1
          %v334 = vadd.f32 %v332, %v333
          %s335 = vtos %v334
          %v336 = vstv %s335
          %v337 = vadd.f32 %v336, 0.0
          %338 = vst [vmem:[%s244] sm:$0xff] %v337
        $region44: #{tpu_custom_call.1} parent=27 // pred_fallthru
          _
        %s339 = sand.u32 %s110, 1
        %s340 = scalar_lea.sflag [#allocation5], %s339
        %s341 = sand.u32 %s110, 1
        %s342 = smul.addr %s341, 8
        %s343 = scalar_lea.vmem [#allocation8], %s342
        // Predicated region
        $region45: #{tpu_custom_call.1} parent=27 // pred_check
          %p344 = pneg %p120
        $region46: #{tpu_custom_call.1} parent=27 // pred_check_branch
          %346 = sbr.rel (%p344) target = $region48
        $region47: #{tpu_custom_call.1} parent=27 // pred_region
          %348 = vsyncadd %s340, 0
          %s349 = smul.addr %s26, 8
          %s350 = scalar_lea.hbm %s2, %s349
          %s352 = sshll.u32 %s343, 4
          %s353 = int_to_ptr.vmem [resolvable:$true] %s352
          %s354 = sshll.u32 %s350, 4
          %s355 = int_to_ptr.hbm [resolvable:$true] %s354
          %357 = dma.vmem_to_hbm [thread:$0]  %s353, 128, %s355, %s340
        $region48: #{tpu_custom_call.1} parent=27 // pred_fallthru
          _
      $region28: #{tpu_custom_call.1} parent=5 // pred_fallthru
        _
      %p358 = scmp.le.s32.totalorder 2, %s17
      // Predicated region
      $region49: #{tpu_custom_call.1} parent=5 // pred_check
        %p359 = pneg %p358
      $region50: #{tpu_custom_call.1} parent=5 // pred_check_branch
        %361 = sbr.rel (%p359) target = $region52
      $region51: #{tpu_custom_call.1} parent=5 // pred_region
        %s362 = ssub.s32 %s17, 2
        // Predicated region
        $region53: #{tpu_custom_call.1} parent=51 // pred_check
          %p363 = pneg %p126
        $region54: #{tpu_custom_call.1} parent=51 // pred_check_branch
          %365 = sbr.rel (%p363) target = $region56
        $region55: #{tpu_custom_call.1} parent=51 // pred_region
          %s366 = sand.u32 %s111, 1
          %s367 = scalar_lea.sflag [#allocation5], %s366
          %s368 = sand.u32 %s111, 1
          %s369 = smul.addr %s368, 8
          %s370 = scalar_lea.vmem [#allocation8], %s369
          %372 = dma.done %s367, 128
        $region56: #{tpu_custom_call.1} parent=51 // pred_fallthru
          _
      $region52: #{tpu_custom_call.1} parent=5 // pred_fallthru
        _
    $region6: #{tpu_custom_call.1} parent=1 // loop_footer
      %s21 = sadd.s32 1, %s17
    $region7: #{tpu_custom_call.1} parent=1 // loop_footer_branch
      %16 = sbr.rel target = $region3
    $region8: #{tpu_custom_call.1} parent=1 // loop_exit
      _
    %373 = vsyncpa [#allocation4], 1
    %s374 = scalar_lea.sflag [#allocation4], 1
    %375 = vsyncpa %s374, 1
    %376 = vsyncpa [#allocation7], 1
    %s377 = scalar_lea.sflag [#allocation7], 1
    %378 = vsyncpa %s377, 1
    %379 = vsyncpa [#allocation5], 1
    %s380 = scalar_lea.sflag [#allocation5], 1
    %381 = vsyncpa %s380, 1

</llo_original>
